<compile_context>
chip_gen: v7x
topology: tpu7x:2x2x1
jax: 0.10.0
libtpu: 0.0.40
codegen_flags: <defaults>
</compile_context>

<pallas_src>
import jax
import jax.numpy as jnp
from jax.experimental import pallas as pl
from jax.experimental.pallas import tpu as pltpu

_PARAM_SHAPE = (1, 3, 256, 256)              # matches the PyTorch module
_PARAM_BYTES = 1 * 3 * 256 * 256 * 4         # 786432 B (float32)


def _identity_dma_kernel(param_hbm, out_hbm, sem):
    # forward() is identity: one contiguous HBM -> HBM DMA of the whole
    # parameter. No VMEM round trip, no TensorCore work, no grid.
    cp = pltpu.make_async_copy(param_hbm, out_hbm, sem)
    cp.start()
    cp.wait()


def output_image_forward(image_out: jax.Array) -> jax.Array:
    """Fastest faithful equivalent of OutputImage.forward().

    PyTorch returns the parameter tensor itself (aliased storage); the JAX
    analogue is simply returning the array — zero launch overhead, zero HBM
    traffic, no fusion barrier.
    """
    return image_out


def output_image_forward_pallas(image_out: jax.Array) -> jax.Array:
    """Pallas variant: materialize the parameter into a fresh output buffer.

    Use only when downstream code genuinely needs a distinct buffer.
    Single HBM->HBM async DMA; both operands stay in HBM (memory_space=ANY).
    """
    return pl.pallas_call(
        _identity_dma_kernel,
        out_shape=jax.ShapeDtypeStruct(image_out.shape, image_out.dtype),
        # Raw HBM refs on both sides: Pallas does no auto-DMA; the kernel
        # body owns the single data movement.
        in_specs=[pl.BlockSpec(memory_space=pl.ANY)],
        out_specs=pl.BlockSpec(memory_space=pl.ANY),
        scratch_shapes=[pltpu.SemaphoreType.DMA(())],
        # Tell XLA this custom call is a ~1 µs memcpy (read + write).
        cost_estimate=pl.CostEstimate(
            flops=0,
            transcendentals=0,
            bytes_accessed=2 * _PARAM_BYTES,
        ),
    )(image_out)


if __name__ == "__main__":
    # Deterministic "parameter" initialization (mirrors torch.randn(1, 3, 256, 256)).
    key = jax.random.PRNGKey(0)
    image_out = jax.random.normal(key, _PARAM_SHAPE, dtype=jnp.float32)

    # Fast path (the recommended production equivalent): aliased return.
    aliased = output_image_forward(image_out)
    assert aliased is image_out

    # Pallas kernel path: fresh buffer via a single HBM->HBM DMA.
    result = jax.block_until_ready(output_image_forward_pallas(image_out))

    # Sanity checks: forward() is identity on the parameter.
    assert result.shape == _PARAM_SHAPE
    assert result.dtype == jnp.float32
    assert bool(jnp.array_equal(result, image_out))

    print("KERNEL_OK")
</pallas_src>

<mosaic_0001>
module attributes {stable_mosaic.version = 11 : i64} {
  func.func @_identity_dma_kernel(%arg0: memref<1x3x256x256xf32, #tpu.memory_space<any>>, %arg1: memref<1x3x256x256xf32, #tpu.memory_space<any>>, %arg2: memref<!tpu.dma_semaphore, #tpu.memory_space<semaphore_mem>>) attributes {dimension_semantics = [], scalar_prefetch = 0 : i64, scratch_operands = 1 : i64, tpu.core_type = #tpu.core_type<tc>} {
    tpu.enqueue_dma source(%arg0 : memref<1x3x256x256xf32, #tpu.memory_space<any>>) target(%arg1 : memref<1x3x256x256xf32, #tpu.memory_space<any>>) target_semaphore(%arg2 : memref<!tpu.dma_semaphore, #tpu.memory_space<semaphore_mem>>)
    tpu.wait_dma2 semaphore(%arg2 : memref<!tpu.dma_semaphore, #tpu.memory_space<semaphore_mem>>) src(%arg0 : memref<1x3x256x256xf32, #tpu.memory_space<any>>) dst(%arg1 : memref<1x3x256x256xf32, #tpu.memory_space<any>>)
    return
  }
}

</mosaic_0001>

<llo_original>
// kernel: tpu_custom_call.1
$region0: #{tpu_custom_call.1}
  #allocation0 [shape = 'u32[]', space=smem, size = 0x4, offset = 0x4, fixed_abs, tag = 'smem constant byte address 0x4 - core index']
  #allocation1 [shape = 'u32[144,128]{1,0:T(1,128)}', space=vmem, size = 0x12000, scoped, tag = 'internal scratch']
  #allocation2 [shape = 's32[1]{0}', space=sflag, size = 0x4, scoped, tag = 'scratch operand']
  #allocation3 [shape = 's32[]', space=sflag, size = 0x4, offset = 0, fixed_abs, tag = 'sflag constant byte address 0x0 - dummy sync flag']
  #allocation4 [shape = 'u32[0]{0}', space=smem, size = 0, offset = 0, fixed_abs, tag = 'smem constant byte address 0x0 - null']
  %s0 = inlined_call_operand.hbm [shape: f32[1,3,256,256], index: 0, kind: input, shape index: {}]
  %s1 = inlined_call_operand.hbm [shape: f32[1,3,256,256], index: 1, kind: output, shape index: {}]
  %s2 = sld [smem:[#allocation0]]
  $region2: #{tpu_custom_call.1} parent=0
    _
  %s4 = ssub.s32 1, %s2
  %s5 = scalar_select 0, %s4, %s2
  %s7 = sshll.u32 1, 14
  %s8 = sxor.u32 4294967295, %s7
  %s11 = sshll.u32 3, 24
  %s12 = sxor.u32 4294967295, %s11
  %s13 = sand.u32 0, %s12
  %s15 = sor.u32 %s13, 0
  %18 = dma.general %s0, 24576, %s1, [#allocation2], [#allocation3], [#allocation4], %s15, 0
  %s19 = smul.u32 8, 1
  %s20 = smul.u32 %s19, 3
  %s21 = smul.u32 %s20, 32
  %s22 = smul.u32 %s21, 2
  %s23 = sshll.u32 %s22, 4
  %24 = dma.done [#allocation2], %s23
  %25 = vsyncmov [#allocation2]
  %s26 = vpop.sfrf %25
  %p27 = scmp.eq.s32.totalorder %s26, 0
  %p28 = pneg %p27
  %30 = shalt.err (%p28)

</llo_original>
